<compile_context>
chip_gen: v7x
topology: tpu7x:2x2x1
jax: 0.10.0
libtpu: 0.0.40
codegen_flags: <defaults>
</compile_context>

<pallas_src>
import functools

import jax
import jax.numpy as jnp
from jax.experimental import pallas as pl
from jax.experimental.pallas import tpu as pltpu


def _round_up(x, m):
    return (x + m - 1) // m * m


# --------------------------------------------------------------------------------------
# Kernel A: multi-layer GRU step + additive attention  ->  hidden', feat = cat(out_h, w)
# --------------------------------------------------------------------------------------
def make_gru_attn_kernel(L, B, S, E, H, Eenc):
    def dotf(a, w_ref_val):
        # MXU in bf16, f32 accumulation. Weights are already bf16; cast activations only.
        return jnp.dot(a.astype(jnp.bfloat16), w_ref_val,
                       preferred_element_type=jnp.float32)

    def kernel(*refs):
        emb_ref, hid_ref, q_ref = refs[0], refs[1], refs[2]
        wcat = refs[3:3 + L]                       # per-layer fused [in_l + H, 3H] bf16
        whhn_ref = refs[3 + L]                     # [L, H, H]   bf16 (n-chunk of W_hh)
        bsum_ref = refs[4 + L]                     # [L, 1, 3H]  f32  (b_ih + b_hh)
        bhhn_ref = refs[5 + L]                     # [L, 1, H]   f32  (b_hh n-chunk)
        awh_ref, awq_ref, ab_ref, av_ref = refs[6 + L:10 + L]
        hid_out_ref, feat_ref = refs[10 + L], refs[11 + L]

        # ------------- multi-layer GRU, seq_len == 1, batched over B -------------
        x = emb_ref[...]                                        # [B, E]  (dropout = id)
        for l in range(L):
            h_prev = hid_ref[l]                                 # [B, H]
            xh = jnp.concatenate([x, h_prev], axis=1)           # [B, in_l + H]
            g = dotf(xh, wcat[l][...]) + bsum_ref[l]            # [B, 3H] == gi + gh
            gh_n = dotf(h_prev, whhn_ref[l]) + bhhn_ref[l]      # [B, H]
            r = jax.nn.sigmoid(g[:, 0:H])
            z = jax.nn.sigmoid(g[:, H:2 * H])
            n = jnp.tanh(g[:, 2 * H:3 * H] + (r - 1.0) * gh_n)  # gi_n + r*gh_n
            h_new = (1.0 - z) * n + z * h_prev                  # [B, H]
            hid_out_ref[l] = h_new
            x = h_new                                           # inter-layer dropout = id
        out_h = x                                               # [B, H]

        # ------------- additive attention (batched over B and S) ----------------
        q = q_ref[...]                                          # [B, S, Eenc]
        hq = dotf(out_h, awh_ref[...]) + ab_ref[...]            # [B, H]  (bias folded in)
        eq = dotf(q.reshape(B * S, Eenc), awq_ref[...])         # [B*S, H]
        energy = jnp.tanh(eq.reshape(B, S, H) + hq[:, None, :])     # [B, S, H]
        scores = dotf(energy.reshape(B * S, H), av_ref[...])        # [B*S, 1] (MXU reduce)
        scores = scores.reshape(B, S, 1)

        m = jnp.max(scores, axis=1, keepdims=True)
        p = jnp.exp(scores - m)
        inv = pl.reciprocal(jnp.sum(p, axis=1, keepdims=True), approx=True)
        attn = p * inv                                           # [B, S, 1]
        weighted = jnp.sum(attn * q, axis=1)                     # [B, Eenc]

        feat = jnp.concatenate([out_h, weighted], axis=1)        # [B, H + Eenc]
        feat_ref[...] = feat.astype(jnp.bfloat16)

    return kernel


# --------------------------------------------------------------------------------------
# Kernel B: tiled output projection  logits_tile = feat @ W_tile + b_tile
# --------------------------------------------------------------------------------------
def vocab_proj_kernel(feat_ref, w_ref, b_ref, out_ref):
    out_ref[...] = (jnp.dot(feat_ref[...], w_ref[...],
                            preferred_element_type=jnp.float32) + b_ref[...])


# --------------------------------------------------------------------------------------
# Parameter construction: weights stored pre-transposed / pre-fused / pre-padded / bf16.
# --------------------------------------------------------------------------------------
def init_params(key, output_dim, emb_dim, enc_hid_dim, dec_hid_dim, num_layers,
                vocab_tile=512):
    H = dec_hid_dim
    keys = iter(jax.random.split(key, 8 + 4 * num_layers))

    def rnd(shape, scale=0.1):
        return jax.random.normal(next(keys), shape, jnp.float32) * scale

    emb = rnd((output_dim, emb_dim))

    gru_wcat, whhn, bsum, bhhn = [], [], [], []
    for l in range(num_layers):
        in_dim = emb_dim if l == 0 else H
        w_ih = rnd((3 * H, in_dim))         # PyTorch layout
        w_hh = rnd((3 * H, H))
        b_ih = rnd((3 * H,))
        b_hh = rnd((3 * H,))
        gru_wcat.append(jnp.concatenate([w_ih.T, w_hh.T], axis=0).astype(jnp.bfloat16))
        whhn.append(w_hh.T[:, 2 * H:3 * H].astype(jnp.bfloat16))   # [H, H]
        bsum.append((b_ih + b_hh)[None, :])                        # [1, 3H]
        bhhn.append(b_hh[None, 2 * H:3 * H])                       # [1, H]

    attn_wh = rnd((H, H))
    attn_wq = rnd((H, enc_hid_dim))
    attn_b = rnd((H,))
    attn_v = rnd((H,))

    # out: Linear(enc_hid + dec_hid -> V) acting on cat(out_h, weighted); transpose,
    # pad V to a lane-dense multiple of the tile, cast to bf16 — all once, here.
    out_w = rnd((output_dim, H + enc_hid_dim))
    out_b = rnd((output_dim,))
    tV = min(vocab_tile, _round_up(output_dim, 128))
    Vpad = _round_up(output_dim, tV)
    out_w_pad = jnp.zeros((H + enc_hid_dim, Vpad), jnp.float32)
    out_w_pad = out_w_pad.at[:, :output_dim].set(out_w.T)
    out_b_pad = jnp.zeros((1, Vpad), jnp.float32).at[0, :output_dim].set(out_b)

    return {
        "embedding": emb,                                   # [V, E]        f32
        "gru_wcat": gru_wcat,                               # L x [in+H,3H] bf16
        "gru_whhn": jnp.stack(whhn),                        # [L, H, H]     bf16
        "gru_bsum": jnp.stack(bsum),                        # [L, 1, 3H]    f32
        "gru_bhhn": jnp.stack(bhhn),                        # [L, 1, H]     f32
        "attn_wh": attn_wh.T.astype(jnp.bfloat16),          # [H, H]
        "attn_wq": attn_wq.T.astype(jnp.bfloat16),          # [Eenc, H]
        "attn_b": attn_b[None, :],                          # [1, H]        f32
        "attn_v": attn_v[:, None].astype(jnp.bfloat16),     # [H, 1]
        "out_w": out_w_pad.astype(jnp.bfloat16),            # [H+Eenc, Vpad]
        "out_b": out_b_pad,                                 # [1, Vpad]     f32
        "output_dim": output_dim,
        "vocab_tile": tV,
    }


# --------------------------------------------------------------------------------------
# Forward wrapper
# --------------------------------------------------------------------------------------
def decoder_forward(src, queries, hidden, params):
    L, B, H = hidden.shape
    _, S, Eenc = queries.shape
    E = params["embedding"].shape[1]
    V = params["output_dim"]
    tV = params["vocab_tile"]
    Vpad = params["out_w"].shape[1]
    F = H + Eenc

    # Glue: embedding gather (dropout = identity in eval mode). No weight transposes here.
    embedded = jnp.take(params["embedding"], src, axis=0)       # [B, E]

    vmem = pl.BlockSpec(memory_space=pltpu.MemorySpace.VMEM)
    inputs_a = [embedded, hidden, queries] + list(params["gru_wcat"]) + [
        params["gru_whhn"], params["gru_bsum"], params["gru_bhhn"],
        params["attn_wh"], params["attn_wq"], params["attn_b"], params["attn_v"],
    ]

    hidden_out, feat = pl.pallas_call(
        make_gru_attn_kernel(L, B, S, E, H, Eenc),
        out_shape=(jax.ShapeDtypeStruct((L, B, H), jnp.float32),
                   jax.ShapeDtypeStruct((B, F), jnp.bfloat16)),
        in_specs=[vmem] * len(inputs_a),
        out_specs=(vmem, vmem),
    )(*inputs_a)

    # Output projection: 1-D grid over lane-dense V tiles; weight/bias tiles are
    # double-buffered by the BlockSpec pipeline, feat stays resident.
    n_tiles = Vpad // tV
    logits_pad = pl.pallas_call(
        vocab_proj_kernel,
        out_shape=jax.ShapeDtypeStruct((B, Vpad), jnp.float32),
        grid=(n_tiles,),
        in_specs=[pl.BlockSpec((B, F), lambda v: (0, 0)),
                  pl.BlockSpec((F, tV), lambda v: (0, v)),
                  pl.BlockSpec((1, tV), lambda v: (0, v))],
        out_specs=pl.BlockSpec((B, tV), lambda v: (0, v)),
        compiler_params=pltpu.CompilerParams(
            dimension_semantics=("parallel",),          # v7x: shard V tiles across TCs
            vmem_limit_bytes=32 * 1024 * 1024),
    )(feat, params["out_w"], params["out_b"])

    return logits_pad[:, :V], hidden_out


# --------------------------------------------------------------------------------------
# Plain-JAX reference (same bf16 weights, f32 math) for a numeric check.
# --------------------------------------------------------------------------------------
def decoder_reference(src, queries, hidden, params):
    L, B, H = hidden.shape
    V = params["output_dim"]
    f32 = jnp.float32
    x = jnp.take(params["embedding"], src, axis=0)
    new_h = []
    for l in range(L):
        wcat = params["gru_wcat"][l].astype(f32)
        in_dim = wcat.shape[0] - H
        w_ih, w_hh = wcat[:in_dim], wcat[in_dim:]
        b_sum = params["gru_bsum"][l, 0]
        b_hhn = params["gru_bhhn"][l, 0]
        h_prev = hidden[l]
        g = x @ w_ih + h_prev @ w_hh + b_sum
        gh_n = h_prev @ w_hh[:, 2 * H:] + b_hhn
        r = jax.nn.sigmoid(g[:, :H])
        z = jax.nn.sigmoid(g[:, H:2 * H])
        n = jnp.tanh(g[:, 2 * H:] - gh_n + r * gh_n)
        h_new = (1.0 - z) * n + z * h_prev
        new_h.append(h_new)
        x = h_new
    out_h = x
    hq = out_h @ params["attn_wh"].astype(f32) + params["attn_b"][0]
    eq = jnp.einsum("bse,eh->bsh", queries, params["attn_wq"].astype(f32))
    energy = jnp.tanh(eq + hq[:, None, :])
    scores = jnp.einsum("bsh,h->bs", energy, params["attn_v"][:, 0].astype(f32))
    a = jax.nn.softmax(scores, axis=1)
    weighted = jnp.einsum("bs,bse->be", a, queries)
    feat = jnp.concatenate([out_h, weighted], axis=1)
    logits = feat @ params["out_w"].astype(f32) + params["out_b"][0]
    return logits[:, :V], jnp.stack(new_h)


if __name__ == "__main__":
    # Small shapes consistent with the module's forward.
    B, S = 4, 8            # batch, source length
    output_dim = 64        # vocab size
    emb_dim = 32
    enc_hid_dim = 32
    dec_hid_dim = 32
    num_layers = 2

    key = jax.random.PRNGKey(0)
    k_src, k_q, k_h, k_p = jax.random.split(key, 4)
    src = jax.random.randint(k_src, (B,), 0, output_dim, dtype=jnp.int32)
    queries = jax.random.normal(k_q, (B, S, enc_hid_dim), jnp.float32)
    hidden = jax.random.normal(k_h, (num_layers, B, dec_hid_dim), jnp.float32)

    params = init_params(k_p, output_dim, emb_dim, enc_hid_dim, dec_hid_dim, num_layers)

    logits, hidden_out = decoder_forward(src, queries, hidden, params)
    jax.block_until_ready((logits, hidden_out))

    ref_logits, ref_hidden = decoder_reference(src, queries, hidden, params)
    assert logits.shape == (B, output_dim)
    assert hidden_out.shape == (num_layers, B, dec_hid_dim)
    # bf16 MXU operands + approx reciprocal vs f32 reference -> loosened tolerance.
    assert jnp.allclose(logits, ref_logits, atol=3e-2, rtol=3e-2)
    assert jnp.allclose(hidden_out, ref_hidden, atol=3e-2, rtol=3e-2)

    print("KERNEL_OK")
</pallas_src>

<mosaic_0001>
module attributes {stable_mosaic.version = 11 : i64} {
  func.func @kernel(%arg0: memref<4x32xf32, #tpu.memory_space<vmem>>, %arg1: memref<2x4x32xf32, #tpu.memory_space<vmem>>, %arg2: memref<4x8x32xf32, #tpu.memory_space<vmem>>, %arg3: memref<64x96xbf16, #tpu.memory_space<vmem>>, %arg4: memref<64x96xbf16, #tpu.memory_space<vmem>>, %arg5: memref<2x32x32xbf16, #tpu.memory_space<vmem>>, %arg6: memref<2x1x96xf32, #tpu.memory_space<vmem>>, %arg7: memref<2x1x32xf32, #tpu.memory_space<vmem>>, %arg8: memref<32x32xbf16, #tpu.memory_space<vmem>>, %arg9: memref<32x32xbf16, #tpu.memory_space<vmem>>, %arg10: memref<1x32xf32, #tpu.memory_space<vmem>>, %arg11: memref<32x1xbf16, #tpu.memory_space<vmem>>, %arg12: memref<2x4x32xf32, #tpu.memory_space<vmem>>, %arg13: memref<4x64xbf16, #tpu.memory_space<vmem>>) attributes {dimension_semantics = [], scalar_prefetch = 0 : i64, scratch_operands = 0 : i64, tpu.core_type = #tpu.core_type<tc>} {
    %c0 = arith.constant 0 : index
    %c0_0 = arith.constant 0 : index
    %0 = vector.load %arg0[%c0, %c0_0] : memref<4x32xf32, #tpu.memory_space<vmem>>, vector<4x32xf32>
    %c0_1 = arith.constant 0 : index
    %c0_2 = arith.constant 0 : index
    %c0_3 = arith.constant 0 : index
    %1 = vector.load %arg1[%c0_1, %c0_2, %c0_3] : memref<2x4x32xf32, #tpu.memory_space<vmem>>, vector<1x4x32xf32>
    %2 = vector.shape_cast %1 : vector<1x4x32xf32> to vector<4x32xf32>
    %3 = tpu.concatenate %0, %2 in 1 : vector<4x32xf32>, vector<4x32xf32> -> vector<4x64xf32>
    %c0_4 = arith.constant 0 : index
    %c0_5 = arith.constant 0 : index
    %4 = vector.load %arg3[%c0_4, %c0_5] : memref<64x96xbf16, #tpu.memory_space<vmem>>, vector<64x96xbf16>
    %5 = arith.truncf %3 : vector<4x64xf32> to vector<4x64xbf16>
    %cst = arith.constant dense<0.000000e+00> : vector<4x96xf32>
    %6 = tpu.matmul %5, %4, %cst {dimension_numbers = #tpu.dot_dimension_numbers<[1], [0], [0], [1], [0, 0, 1, 1], [], []>} : vector<4x64xbf16>, vector<64x96xbf16>, vector<4x96xf32> -> vector<4x96xf32>
    %c0_6 = arith.constant 0 : index
    %c0_7 = arith.constant 0 : index
    %c0_8 = arith.constant 0 : index
    %7 = vector.load %arg6[%c0_6, %c0_7, %c0_8] : memref<2x1x96xf32, #tpu.memory_space<vmem>>, vector<1x1x96xf32>
    %8 = vector.shape_cast %7 : vector<1x1x96xf32> to vector<1x96xf32>
    %9 = vector.broadcast %8 : vector<1x96xf32> to vector<4x96xf32>
    %10 = arith.addf %6, %9 : vector<4x96xf32>
    %c0_9 = arith.constant 0 : index
    %c0_10 = arith.constant 0 : index
    %c0_11 = arith.constant 0 : index
    %11 = vector.load %arg5[%c0_9, %c0_10, %c0_11] : memref<2x32x32xbf16, #tpu.memory_space<vmem>>, vector<1x32x32xbf16>
    %12 = vector.shape_cast %11 : vector<1x32x32xbf16> to vector<32x32xbf16>
    %13 = arith.truncf %2 : vector<4x32xf32> to vector<4x32xbf16>
    %cst_12 = arith.constant dense<0.000000e+00> : vector<4x32xf32>
    %14 = tpu.matmul %13, %12, %cst_12 {dimension_numbers = #tpu.dot_dimension_numbers<[1], [0], [0], [1], [0, 0, 1, 1], [], []>} : vector<4x32xbf16>, vector<32x32xbf16>, vector<4x32xf32> -> vector<4x32xf32>
    %c0_13 = arith.constant 0 : index
    %c0_14 = arith.constant 0 : index
    %c0_15 = arith.constant 0 : index
    %15 = vector.load %arg7[%c0_13, %c0_14, %c0_15] : memref<2x1x32xf32, #tpu.memory_space<vmem>>, vector<1x1x32xf32>
    %16 = vector.shape_cast %15 : vector<1x1x32xf32> to vector<1x32xf32>
    %17 = vector.broadcast %16 : vector<1x32xf32> to vector<4x32xf32>
    %18 = arith.addf %14, %17 : vector<4x32xf32>
    %19 = vector.extract_strided_slice %10 {offsets = [0, 0], sizes = [4, 32], strides = [1, 1]} : vector<4x96xf32> to vector<4x32xf32>
    %20 = arith.negf %19 : vector<4x32xf32>
    %21 = math.exp %20 : vector<4x32xf32>
    %cst_16 = arith.constant 1.000000e+00 : f32
    %22 = vector.broadcast %cst_16 : f32 to vector<4x32xf32>
    %23 = arith.addf %22, %21 : vector<4x32xf32>
    %24 = arith.divf %22, %23 : vector<4x32xf32>
    %25 = vector.extract_strided_slice %10 {offsets = [0, 32], sizes = [4, 32], strides = [1, 1]} : vector<4x96xf32> to vector<4x32xf32>
    %26 = arith.negf %25 : vector<4x32xf32>
    %27 = math.exp %26 : vector<4x32xf32>
    %cst_17 = arith.constant 1.000000e+00 : f32
    %28 = vector.broadcast %cst_17 : f32 to vector<4x32xf32>
    %29 = arith.addf %28, %27 : vector<4x32xf32>
    %30 = arith.divf %28, %29 : vector<4x32xf32>
    %31 = vector.extract_strided_slice %10 {offsets = [0, 64], sizes = [4, 32], strides = [1, 1]} : vector<4x96xf32> to vector<4x32xf32>
    %cst_18 = arith.constant 1.000000e+00 : f32
    %32 = vector.broadcast %cst_18 : f32 to vector<4x32xf32>
    %33 = arith.subf %24, %32 : vector<4x32xf32>
    %34 = arith.mulf %33, %18 : vector<4x32xf32>
    %35 = arith.addf %31, %34 : vector<4x32xf32>
    %36 = math.tanh %35 : vector<4x32xf32>
    %cst_19 = arith.constant 1.000000e+00 : f32
    %37 = vector.broadcast %cst_19 : f32 to vector<4x32xf32>
    %38 = arith.subf %37, %30 : vector<4x32xf32>
    %39 = arith.mulf %38, %36 : vector<4x32xf32>
    %40 = arith.mulf %30, %2 : vector<4x32xf32>
    %41 = arith.addf %39, %40 : vector<4x32xf32>
    %c0_20 = arith.constant 0 : index
    %c0_21 = arith.constant 0 : index
    %c0_22 = arith.constant 0 : index
    %42 = vector.load %arg12[%c0_20, %c0_21, %c0_22] : memref<2x4x32xf32, #tpu.memory_space<vmem>>, vector<1x4x32xf32>
    %43 = vector.shape_cast %42 : vector<1x4x32xf32> to vector<4x32xf32>
    %44 = vector.shape_cast %41 : vector<4x32xf32> to vector<1x4x32xf32>
    tpu.vector_store %arg12[%c0_20, %c0_21, %c0_22], %44 {strides = array<i32>} : memref<2x4x32xf32, #tpu.memory_space<vmem>>, vector<1x4x32xf32>,
    %c1 = arith.constant 1 : index
    %c0_23 = arith.constant 0 : index
    %c0_24 = arith.constant 0 : index
    %45 = vector.load %arg1[%c1, %c0_23, %c0_24] : memref<2x4x32xf32, #tpu.memory_space<vmem>>, vector<1x4x32xf32>
    %46 = vector.shape_cast %45 : vector<1x4x32xf32> to vector<4x32xf32>
    %47 = tpu.concatenate %41, %46 in 1 : vector<4x32xf32>, vector<4x32xf32> -> vector<4x64xf32>
    %c0_25 = arith.constant 0 : index
    %c0_26 = arith.constant 0 : index
    %48 = vector.load %arg4[%c0_25, %c0_26] : memref<64x96xbf16, #tpu.memory_space<vmem>>, vector<64x96xbf16>
    %49 = arith.truncf %47 : vector<4x64xf32> to vector<4x64xbf16>
    %cst_27 = arith.constant dense<0.000000e+00> : vector<4x96xf32>
    %50 = tpu.matmul %49, %48, %cst_27 {dimension_numbers = #tpu.dot_dimension_numbers<[1], [0], [0], [1], [0, 0, 1, 1], [], []>} : vector<4x64xbf16>, vector<64x96xbf16>, vector<4x96xf32> -> vector<4x96xf32>
    %c1_28 = arith.constant 1 : index
    %c0_29 = arith.constant 0 : index
    %c0_30 = arith.constant 0 : index
    %51 = vector.load %arg6[%c1_28, %c0_29, %c0_30] : memref<2x1x96xf32, #tpu.memory_space<vmem>>, vector<1x1x96xf32>
    %52 = vector.shape_cast %51 : vector<1x1x96xf32> to vector<1x96xf32>
    %53 = vector.broadcast %52 : vector<1x96xf32> to vector<4x96xf32>
    %54 = arith.addf %50, %53 : vector<4x96xf32>
    %c1_31 = arith.constant 1 : index
    %c0_32 = arith.constant 0 : index
    %c0_33 = arith.constant 0 : index
    %55 = vector.load %arg5[%c1_31, %c0_32, %c0_33] : memref<2x32x32xbf16, #tpu.memory_space<vmem>>, vector<1x32x32xbf16>
    %56 = vector.shape_cast %55 : vector<1x32x32xbf16> to vector<32x32xbf16>
    %57 = arith.truncf %46 : vector<4x32xf32> to vector<4x32xbf16>
    %cst_34 = arith.constant dense<0.000000e+00> : vector<4x32xf32>
    %58 = tpu.matmul %57, %56, %cst_34 {dimension_numbers = #tpu.dot_dimension_numbers<[1], [0], [0], [1], [0, 0, 1, 1], [], []>} : vector<4x32xbf16>, vector<32x32xbf16>, vector<4x32xf32> -> vector<4x32xf32>
    %c1_35 = arith.constant 1 : index
    %c0_36 = arith.constant 0 : index
    %c0_37 = arith.constant 0 : index
    %59 = vector.load %arg7[%c1_35, %c0_36, %c0_37] : memref<2x1x32xf32, #tpu.memory_space<vmem>>, vector<1x1x32xf32>
    %60 = vector.shape_cast %59 : vector<1x1x32xf32> to vector<1x32xf32>
    %61 = vector.broadcast %60 : vector<1x32xf32> to vector<4x32xf32>
    %62 = arith.addf %58, %61 : vector<4x32xf32>
    %63 = vector.extract_strided_slice %54 {offsets = [0, 0], sizes = [4, 32], strides = [1, 1]} : vector<4x96xf32> to vector<4x32xf32>
    %64 = arith.negf %63 : vector<4x32xf32>
    %65 = math.exp %64 : vector<4x32xf32>
    %cst_38 = arith.constant 1.000000e+00 : f32
    %66 = vector.broadcast %cst_38 : f32 to vector<4x32xf32>
    %67 = arith.addf %66, %65 : vector<4x32xf32>
    %68 = arith.divf %66, %67 : vector<4x32xf32>
    %69 = vector.extract_strided_slice %54 {offsets = [0, 32], sizes = [4, 32], strides = [1, 1]} : vector<4x96xf32> to vector<4x32xf32>
    %70 = arith.negf %69 : vector<4x32xf32>
    %71 = math.exp %70 : vector<4x32xf32>
    %cst_39 = arith.constant 1.000000e+00 : f32
    %72 = vector.broadcast %cst_39 : f32 to vector<4x32xf32>
    %73 = arith.addf %72, %71 : vector<4x32xf32>
    %74 = arith.divf %72, %73 : vector<4x32xf32>
    %75 = vector.extract_strided_slice %54 {offsets = [0, 64], sizes = [4, 32], strides = [1, 1]} : vector<4x96xf32> to vector<4x32xf32>
    %cst_40 = arith.constant 1.000000e+00 : f32
    %76 = vector.broadcast %cst_40 : f32 to vector<4x32xf32>
    %77 = arith.subf %68, %76 : vector<4x32xf32>
    %78 = arith.mulf %77, %62 : vector<4x32xf32>
    %79 = arith.addf %75, %78 : vector<4x32xf32>
    %80 = math.tanh %79 : vector<4x32xf32>
    %cst_41 = arith.constant 1.000000e+00 : f32
    %81 = vector.broadcast %cst_41 : f32 to vector<4x32xf32>
    %82 = arith.subf %81, %74 : vector<4x32xf32>
    %83 = arith.mulf %82, %80 : vector<4x32xf32>
    %84 = arith.mulf %74, %46 : vector<4x32xf32>
    %85 = arith.addf %83, %84 : vector<4x32xf32>
    %c1_42 = arith.constant 1 : index
    %c0_43 = arith.constant 0 : index
    %c0_44 = arith.constant 0 : index
    %86 = vector.load %arg12[%c1_42, %c0_43, %c0_44] : memref<2x4x32xf32, #tpu.memory_space<vmem>>, vector<1x4x32xf32>
    %87 = vector.shape_cast %86 : vector<1x4x32xf32> to vector<4x32xf32>
    %88 = vector.shape_cast %85 : vector<4x32xf32> to vector<1x4x32xf32>
    tpu.vector_store %arg12[%c1_42, %c0_43, %c0_44], %88 {strides = array<i32>} : memref<2x4x32xf32, #tpu.memory_space<vmem>>, vector<1x4x32xf32>,
    %c0_45 = arith.constant 0 : index
    %c0_46 = arith.constant 0 : index
    %c0_47 = arith.constant 0 : index
    %89 = vector.load %arg2[%c0_45, %c0_46, %c0_47] : memref<4x8x32xf32, #tpu.memory_space<vmem>>, vector<4x8x32xf32>
    %c0_48 = arith.constant 0 : index
    %c0_49 = arith.constant 0 : index
    %90 = vector.load %arg8[%c0_48, %c0_49] : memref<32x32xbf16, #tpu.memory_space<vmem>>, vector<32x32xbf16>
    %91 = arith.truncf %85 : vector<4x32xf32> to vector<4x32xbf16>
    %cst_50 = arith.constant dense<0.000000e+00> : vector<4x32xf32>
    %92 = tpu.matmul %91, %90, %cst_50 {dimension_numbers = #tpu.dot_dimension_numbers<[1], [0], [0], [1], [0, 0, 1, 1], [], []>} : vector<4x32xbf16>, vector<32x32xbf16>, vector<4x32xf32> -> vector<4x32xf32>
    %c0_51 = arith.constant 0 : index
    %c0_52 = arith.constant 0 : index
    %93 = vector.load %arg10[%c0_51, %c0_52] : memref<1x32xf32, #tpu.memory_space<vmem>>, vector<1x32xf32>
    %94 = vector.broadcast %93 : vector<1x32xf32> to vector<4x32xf32>
    %95 = arith.addf %92, %94 : vector<4x32xf32>
    %96 = vector.shape_cast %89 : vector<4x8x32xf32> to vector<32x32xf32>
    %c0_53 = arith.constant 0 : index
    %c0_54 = arith.constant 0 : index
    %97 = vector.load %arg9[%c0_53, %c0_54] : memref<32x32xbf16, #tpu.memory_space<vmem>>, vector<32x32xbf16>
    %98 = arith.truncf %96 : vector<32x32xf32> to vector<32x32xbf16>
    %cst_55 = arith.constant dense<0.000000e+00> : vector<32x32xf32>
    %99 = tpu.matmul %98, %97, %cst_55 {dimension_numbers = #tpu.dot_dimension_numbers<[1], [0], [0], [1], [0, 0, 1, 1], [], []>} : vector<32x32xbf16>, vector<32x32xbf16>, vector<32x32xf32> -> vector<32x32xf32>
    %100 = vector.shape_cast %99 : vector<32x32xf32> to vector<4x8x32xf32>
    %101 = vector.shape_cast %95 : vector<4x32xf32> to vector<4x1x32xf32>
    %102 = vector.broadcast %101 : vector<4x1x32xf32> to vector<4x8x32xf32>
    %103 = arith.addf %100, %102 : vector<4x8x32xf32>
    %104 = math.tanh %103 : vector<4x8x32xf32>
    %105 = vector.shape_cast %104 : vector<4x8x32xf32> to vector<32x32xf32>
    %c0_56 = arith.constant 0 : index
    %c0_57 = arith.constant 0 : index
    %106 = vector.load %arg11[%c0_56, %c0_57] : memref<32x1xbf16, #tpu.memory_space<vmem>>, vector<32x1xbf16>
    %107 = arith.truncf %105 : vector<32x32xf32> to vector<32x32xbf16>
    %cst_58 = arith.constant dense<0.000000e+00> : vector<32x1xf32>
    %108 = tpu.matmul %107, %106, %cst_58 {dimension_numbers = #tpu.dot_dimension_numbers<[1], [0], [0], [1], [0, 0, 1, 1], [], []>} : vector<32x32xbf16>, vector<32x1xbf16>, vector<32x1xf32> -> vector<32x1xf32>
    %109 = vector.shape_cast %108 : vector<32x1xf32> to vector<4x8x1xf32>
    %cst_59 = arith.constant dense<0xFF800000> : vector<4x1xf32>
    %110 = vector.multi_reduction <maximumf>, %109, %cst_59 [1] : vector<4x8x1xf32> to vector<4x1xf32>
    %111 = vector.shape_cast %110 : vector<4x1xf32> to vector<4x1x1xf32>
    %112 = vector.broadcast %111 : vector<4x1x1xf32> to vector<4x8x1xf32>
    %113 = arith.subf %109, %112 : vector<4x8x1xf32>
    %114 = math.exp %113 : vector<4x8x1xf32>
    %cst_60 = arith.constant dense<0.000000e+00> : vector<4x1xf32>
    %115 = vector.multi_reduction <add>, %114, %cst_60 [1] : vector<4x8x1xf32> to vector<4x1xf32>
    %116 = vector.shape_cast %115 : vector<4x1xf32> to vector<4x1x1xf32>
    %117 = tpu.reciprocal %116 {approx = true} : vector<4x1x1xf32> -> vector<4x1x1xf32>
    %118 = vector.broadcast %117 : vector<4x1x1xf32> to vector<4x8x1xf32>
    %119 = arith.mulf %114, %118 : vector<4x8x1xf32>
    %120 = vector.broadcast %119 : vector<4x8x1xf32> to vector<4x8x32xf32>
    %121 = arith.mulf %120, %89 : vector<4x8x32xf32>
    %cst_61 = arith.constant dense<0.000000e+00> : vector<4x32xf32>
    %122 = vector.multi_reduction <add>, %121, %cst_61 [1] : vector<4x8x32xf32> to vector<4x32xf32>
    %123 = tpu.concatenate %85, %122 in 1 : vector<4x32xf32>, vector<4x32xf32> -> vector<4x64xf32>
    %124 = arith.truncf %123 : vector<4x64xf32> to vector<4x64xbf16>
    %c0_62 = arith.constant 0 : index
    %c0_63 = arith.constant 0 : index
    %125 = vector.load %arg13[%c0_62, %c0_63] : memref<4x64xbf16, #tpu.memory_space<vmem>>, vector<4x64xbf16>
    tpu.vector_store %arg13[%c0_62, %c0_63], %124 {strides = array<i32>} : memref<4x64xbf16, #tpu.memory_space<vmem>>, vector<4x64xbf16>,
    return
  }
}

</mosaic_0001>

<llo_original>
// kernel: tpu_custom_call.1
$region0: #{tpu_custom_call.1}
  #allocation0 [shape = 'u32[]', space=smem, size = 0x4, offset = 0x4, fixed_abs, tag = 'smem constant byte address 0x4 - core index']
  #allocation1 [shape = 'u32[144,128]{1,0:T(1,128)}', space=vmem, size = 0x12000, scoped, tag = 'internal scratch']
  %s0 = inlined_call_operand.hbm [shape: f32[4,32], index: 0, kind: input, shape index: {}]
  %s1 = inlined_call_operand.hbm [shape: f32[2,4,32], index: 1, kind: input, shape index: {}]
  %s2 = inlined_call_operand.hbm [shape: f32[4,8,32], index: 2, kind: input, shape index: {}]
  %s3 = inlined_call_operand.hbm [shape: bf16[64,96], index: 3, kind: input, shape index: {}]
  %s4 = inlined_call_operand.vmem [shape: bf16[64,96], index: 4, kind: input, shape index: {}]
  %s5 = inlined_call_operand.hbm [shape: bf16[2,32,32], index: 5, kind: input, shape index: {}]
  %s6 = inlined_call_operand.vmem [shape: f32[2,1,96], index: 6, kind: input, shape index: {}]
  %s7 = inlined_call_operand.hbm [shape: f32[2,1,32], index: 7, kind: input, shape index: {}]
  %s8 = inlined_call_operand.hbm [shape: bf16[32,32], index: 8, kind: input, shape index: {}]
  %s9 = inlined_call_operand.vmem [shape: bf16[32,32], index: 9, kind: input, shape index: {}]
  %s10 = inlined_call_operand.vmem [shape: f32[1,32], index: 10, kind: input, shape index: {}]
  %s11 = inlined_call_operand.vmem [shape: bf16[32,1], index: 11, kind: input, shape index: {}]
  %s12 = inlined_call_operand.hbm [shape: f32[2,4,32], index: 12, kind: output, shape index: {0}]
  %s13 = inlined_call_operand.hbm [shape: bf16[4,64], index: 13, kind: output, shape index: {1}]
  %14 = xla_tuple %s12, %s13
  %s15 = sld [smem:[#allocation0]]
  $region94: #{tpu_custom_call.1} parent=0
    _
  %s17 = ssub.s32 1, %s15
  %s18 = scalar_select 0, %s17, %s15
  $region1: #{tpu_custom_call.1} parent=0
    #allocation2 [shape = 'u8[2048]{0}', space=vmem, size = 0x800, scoped, tag = 'input window, operand 0, single buffered']
    #allocation3 [shape = 's32[1]{0}', space=sflag, size = 0x4, scoped, tag = 'scoped memory for tpu_custom_call.1']
    #allocation4 [shape = 's32[1]{0}', space=sflag, size = 0x4, scoped, tag = 'scoped memory for tpu_custom_call.1']
    #allocation5 [shape = 'u8[4096]{0}', space=vmem, size = 0x1000, scoped, tag = 'input window, operand 1, single buffered']
    #allocation6 [shape = 's32[1]{0}', space=sflag, size = 0x4, scoped, tag = 'scoped memory for tpu_custom_call.1']
    #allocation7 [shape = 'u8[16384]{0}', space=vmem, size = 0x4000, scoped, tag = 'input window, operand 2, single buffered']
    #allocation8 [shape = 'u8[16384]{0}', space=vmem, size = 0x4000, scoped, tag = 'input window, operand 3, single buffered']
    #allocation9 [shape = 's32[1]{0}', space=sflag, size = 0x4, scoped, tag = 'scoped memory for tpu_custom_call.1']
    #allocation10 [shape = 'u8[16384]{0}', space=vmem, size = 0x4000, scoped, tag = 'input window, operand 5, single buffered']
    #allocation11 [shape = 'u8[1024]{0}', space=vmem, size = 0x400, scoped, tag = 'input window, operand 7, single buffered']
    #allocation12 [shape = 's32[1]{0}', space=sflag, size = 0x4, scoped, tag = 'scoped memory for tpu_custom_call.1']
    #allocation13 [shape = 'u8[8192]{0}', space=vmem, size = 0x2000, scoped, tag = 'input window, operand 8, single buffered']
    #allocation14 [shape = 'u8[4096]{0}', space=vmem, size = 0x1000, scoped, tag = 'output window, operand 0, single buffered']
    #allocation15 [shape = 'u8[1024]{0}', space=vmem, size = 0x400, scoped, tag = 'output window, operand 1, single buffered']
    #allocation16 [shape = 's32[1]{0}', space=sflag, size = 0x4, scoped, tag = 'scoped memory for tpu_custom_call.1']
    %19 = vsyncpa [#allocation3], 0
    %20 = vsyncpa [#allocation6], 0
    %21 = vsyncpa [#allocation9], 0
    %22 = vsyncpa [#allocation12], 0
    %23 = vsyncpa [#allocation4], 0
    %24 = vsyncpa [#allocation16], 0
    // Predicated region
    $region2: #{tpu_custom_call.1} parent=1 // pred_check
      _
    $region3: #{tpu_custom_call.1} parent=1 // pred_check_branch
      %26 = sbr.rel (0) target = $region5
    $region4: #{tpu_custom_call.1} parent=1 // pred_region
      %s28 = ssub.s32 64, 64
      %29 = vsyncadd [#allocation3], %s28
      %s31 = sshll.u32 [#allocation2], 4
      %s32 = int_to_ptr.vmem [resolvable:$true] %s31
      %34 = dma.hbm_to_vmem [thread:$0]  %s0, 64, %s32, [#allocation3]
    $region5: #{tpu_custom_call.1} parent=1 // pred_fallthru
      _
    // Predicated region
    $region6: #{tpu_custom_call.1} parent=1 // pred_check
      _
    $region7: #{tpu_custom_call.1} parent=1 // pred_check_branch
      %36 = sbr.rel (0) target = $region9
    $region8: #{tpu_custom_call.1} parent=1 // pred_region
      %s38 = ssub.s32 128, 128
      %39 = vsyncadd [#allocation6], %s38
      %s40 = sshll.u32 [#allocation5], 4
      %s41 = int_to_ptr.vmem [resolvable:$true] %s40
      %46 = dma.hbm_to_vmem [thread:$0]  %s1, 128, %s41, [#allocation6], 64, 64, 4
    $region9: #{tpu_custom_call.1} parent=1 // pred_fallthru
      _
    // Predicated region
    $region10: #{tpu_custom_call.1} parent=1 // pred_check
      _
    $region11: #{tpu_custom_call.1} parent=1 // pred_check_branch
      %48 = sbr.rel (0) target = $region13
    $region12: #{tpu_custom_call.1} parent=1 // pred_region
      %s50 = ssub.s32 512, 512
      %51 = vsyncadd [#allocation6], %s50
      %s52 = sshll.u32 [#allocation7], 4
      %s53 = int_to_ptr.vmem [resolvable:$true] %s52
      %58 = dma.hbm_to_vmem [thread:$0]  %s2, 512, %s53, [#allocation6], 128, 128, 8
    $region13: #{tpu_custom_call.1} parent=1 // pred_fallthru
      _
    // Predicated region
    $region14: #{tpu_custom_call.1} parent=1 // pred_check
      _
    $region15: #{tpu_custom_call.1} parent=1 // pred_check_branch
      %60 = sbr.rel (0) target = $region17
    $region16: #{tpu_custom_call.1} parent=1 // pred_region
      %s62 = ssub.s32 512, 512
      %63 = vsyncadd [#allocation9], %s62
      %s64 = sshll.u32 [#allocation8], 4
      %s65 = int_to_ptr.vmem [resolvable:$true] %s64
      %70 = dma.hbm_to_vmem [thread:$0]  %s3, 512, %s65, [#allocation9], 64, 64, 4
    $region17: #{tpu_custom_call.1} parent=1 // pred_fallthru
      _
    // Predicated region
    $region18: #{tpu_custom_call.1} parent=1 // pred_check
      _
    $region19: #{tpu_custom_call.1} parent=1 // pred_check_branch
      %72 = sbr.rel (0) target = $region21
    $region20: #{tpu_custom_call.1} parent=1 // pred_region
      _
    $region21: #{tpu_custom_call.1} parent=1 // pred_fallthru
      _
    // Predicated region
    $region22: #{tpu_custom_call.1} parent=1 // pred_check
      _
    $region23: #{tpu_custom_call.1} parent=1 // pred_check_branch
      %74 = sbr.rel (0) target = $region25
    $region24: #{tpu_custom_call.1} parent=1 // pred_region
      %s76 = ssub.s32 512, 512
      %77 = vsyncadd [#allocation9], %s76
      %s78 = sshll.u32 [#allocation10], 4
      %s79 = int_to_ptr.vmem [resolvable:$true] %s78
      %84 = dma.hbm_to_vmem [thread:$0]  %s5, 512, %s79, [#allocation9], 64, 64, 4
    $region25: #{tpu_custom_call.1} parent=1 // pred_fallthru
      _
    // Predicated region
    $region26: #{tpu_custom_call.1} parent=1 // pred_check
      _
    $region27: #{tpu_custom_call.1} parent=1 // pred_check_branch
      %86 = sbr.rel (0) target = $region29
    $region28: #{tpu_custom_call.1} parent=1 // pred_region
      _
    $region29: #{tpu_custom_call.1} parent=1 // pred_fallthru
      _
    // Predicated region
    $region30: #{tpu_custom_call.1} parent=1 // pred_check
      _
    $region31: #{tpu_custom_call.1} parent=1 // pred_check_branch
      %88 = sbr.rel (0) target = $region33
    $region32: #{tpu_custom_call.1} parent=1 // pred_region
      %s90 = ssub.s32 32, 32
      %91 = vsyncadd [#allocation12], %s90
      %s92 = sshll.u32 [#allocation11], 4
      %s93 = int_to_ptr.vmem [resolvable:$true] %s92
      %98 = dma.hbm_to_vmem [thread:$0]  %s7, 32, %s93, [#allocation12], 16, 16, 1
    $region33: #{tpu_custom_call.1} parent=1 // pred_fallthru
      _
    // Predicated region
    $region34: #{tpu_custom_call.1} parent=1 // pred_check
      _
    $region35: #{tpu_custom_call.1} parent=1 // pred_check_branch
      %100 = sbr.rel (0) target = $region37
    $region36: #{tpu_custom_call.1} parent=1 // pred_region
      %s102 = ssub.s32 256, 256
      %103 = vsyncadd [#allocation12], %s102
      %s104 = sshll.u32 [#allocation13], 4
      %s105 = int_to_ptr.vmem [resolvable:$true] %s104
      %110 = dma.hbm_to_vmem [thread:$0]  %s8, 256, %s105, [#allocation12], 64, 64, 4
    $region37: #{tpu_custom_call.1} parent=1 // pred_fallthru
      _
    // Predicated region
    $region38: #{tpu_custom_call.1} parent=1 // pred_check
      _
    $region39: #{tpu_custom_call.1} parent=1 // pred_check_branch
      %112 = sbr.rel (0) target = $region41
    $region40: #{tpu_custom_call.1} parent=1 // pred_region
      _
    $region41: #{tpu_custom_call.1} parent=1 // pred_fallthru
      _
    // Predicated region
    $region42: #{tpu_custom_call.1} parent=1 // pred_check
      _
    $region43: #{tpu_custom_call.1} parent=1 // pred_check_branch
      %114 = sbr.rel (0) target = $region45
    $region44: #{tpu_custom_call.1} parent=1 // pred_region
      _
    $region45: #{tpu_custom_call.1} parent=1 // pred_fallthru
      _
    // Predicated region
    $region46: #{tpu_custom_call.1} parent=1 // pred_check
      _
    $region47: #{tpu_custom_call.1} parent=1 // pred_check_branch
      %116 = sbr.rel (0) target = $region49
    $region48: #{tpu_custom_call.1} parent=1 // pred_region
      _
    $region49: #{tpu_custom_call.1} parent=1 // pred_fallthru
      _
    // Predicated region
    $region50: #{tpu_custom_call.1} parent=1 // pred_check
      _
    $region51: #{tpu_custom_call.1} parent=1 // pred_check_branch
      %118 = sbr.rel (0) target = $region53
    $region52: #{tpu_custom_call.1} parent=1 // pred_region
      %119 = dma.done [#allocation3], 64
    $region53: #{tpu_custom_call.1} parent=1 // pred_fallthru
      _
    // Predicated region
    $region54: #{tpu_custom_call.1} parent=1 // pred_check
      _
    $region55: #{tpu_custom_call.1} parent=1 // pred_check_branch
      %121 = sbr.rel (0) target = $region57
    $region56: #{tpu_custom_call.1} parent=1 // pred_region
      %122 = dma.done [#allocation6], 128
    $region57: #{tpu_custom_call.1} parent=1 // pred_fallthru
      _
    // Predicated region
    $region58: #{tpu_custom_call.1} parent=1 // pred_check
      _
    $region59: #{tpu_custom_call.1} parent=1 // pred_check_branch
      %124 = sbr.rel (0) target = $region61
    $region60: #{tpu_custom_call.1} parent=1 // pred_region
      %125 = dma.done [#allocation6], 512
    $region61: #{tpu_custom_call.1} parent=1 // pred_fallthru
      _
    // Predicated region
    $region62: #{tpu_custom_call.1} parent=1 // pred_check
      _
    $region63: #{tpu_custom_call.1} parent=1 // pred_check_branch
      %127 = sbr.rel (0) target = $region65
    $region64: #{tpu_custom_call.1} parent=1 // pred_region
      %128 = dma.done [#allocation9], 512
    $region65: #{tpu_custom_call.1} parent=1 // pred_fallthru
      _
    // Predicated region
    $region66: #{tpu_custom_call.1} parent=1 // pred_check
      _
    $region67: #{tpu_custom_call.1} parent=1 // pred_check_branch
      %130 = sbr.rel (0) target = $region69
    $region68: #{tpu_custom_call.1} parent=1 // pred_region
      %131 = dma.done [#allocation9], 512
    $region69: #{tpu_custom_call.1} parent=1 // pred_fallthru
      _
    // Predicated region
    $region70: #{tpu_custom_call.1} parent=1 // pred_check
      _
    $region71: #{tpu_custom_call.1} parent=1 // pred_check_branch
      %133 = sbr.rel (0) target = $region73
    $region72: #{tpu_custom_call.1} parent=1 // pred_region
      %134 = dma.done [#allocation12], 32
    $region73: #{tpu_custom_call.1} parent=1 // pred_fallthru
      _
    // Predicated region
    $region74: #{tpu_custom_call.1} parent=1 // pred_check
      _
    $region75: #{tpu_custom_call.1} parent=1 // pred_check_branch
      %136 = sbr.rel (0) target = $region77
    $region76: #{tpu_custom_call.1} parent=1 // pred_region
      %137 = dma.done [#allocation12], 256
    $region77: #{tpu_custom_call.1} parent=1 // pred_fallthru
      _
    %v139 = vld [vmem:[#allocation2] sm:$0xf]
    %v140 = vld [vmem:[#allocation5] sm:$0xf]
    %142 = vrot.lane.b32.xlu0 %v140, 32
    %v143 = vpop.permute.xlu0 %142
    %vm145 = vcmask 261120
    %v146 = vsel %vm145, %v139, %v143
    %v147 = vld [vmem:[#allocation8] sm:$0xf]
    %v148 = vld [vmem:[#allocation8 + $0x4] sm:$0xf]
    %v149 = vld [vmem:[#allocation8 + $0x8] sm:$0xf]
    %v150 = vld [vmem:[#allocation8 + $0xc] sm:$0xf]
    %v151 = vld [vmem:[#allocation8 + $0x10] sm:$0xf]
    %v152 = vld [vmem:[#allocation8 + $0x14] sm:$0xf]
    %v153 = vld [vmem:[#allocation8 + $0x18] sm:$0xf]
    %v154 = vld [vmem:[#allocation8 + $0x1c] sm:$0xf]
    %v155 = vpack.c.bf16 %v146, %v146
    %v156 = vld [vmem:[%s6] sm:$0x1]
    %v158 = vlaneseq
    %v159 = vshrl.u32 %v158, 7
    %v160 = vsub.s32 0, %v159
    %v161 = vrot.slane %v156, %v160
    %v171 = vunpack.c.l.b16 %v147
    %v172 = vunpack.c.l.b16 %v148
    %v173 = vunpack.c.l.b16 %v149
    %v174 = vunpack.c.l.b16 %v150
    %v175 = vunpack.c.l.b16 %v151
    %v176 = vunpack.c.l.b16 %v152
    %v177 = vunpack.c.l.b16 %v153
    %v178 = vunpack.c.l.b16 %v154
    %v179 = vpack.c.b16 %v172, %v171
    %v180 = vpack.c.b16 %v174, %v173
    %v181 = vpack.c.b16 %v176, %v175
    %v182 = vpack.c.b16 %v178, %v177
    %vm187 = vcmask 523264
    %v189 = vsel %vm187, %v155, 0
    %191 = vmatprep.subr.bf16.mxu0 0
    %192 = vmatpush1.bf16.msra.mxu0 %v179
    %193 = vmatprep.subr.bf16.mxu0 0
    %194 = vmatpush1.bf16.msra.mxu0 %v180
    %195 = vmatprep.subr.bf16.mxu0 0
    %196 = vmatpush1.bf16.msra.mxu0 %v181
    %197 = vmatprep.subr.bf16.mxu0 0
    %198 = vmatpush1.bf16.msra.mxu0 %v182
    %199 = vmatprep.subr.bf16.mxu0 0
    %200 = vmatpush1.bf16.msra.mxu0 0
    %201 = vmatprep.subr.bf16.mxu0 0
    %202 = vmatpush1.bf16.msra.mxu0 0
    %203 = vmatprep.subr.bf16.mxu0 0
    %204 = vmatpush1.bf16.msra.mxu0 0
    %205 = vmatprep.subr.bf16.mxu0 0
    %206 = vmatpush1.bf16.msra.mxu0 0
    %207 = vmatprep.subr.bf16.mxu0 0
    %208 = vmatpush1.bf16.msra.mxu0 0
    %209 = vmatprep.subr.bf16.mxu0 0
    %210 = vmatpush1.bf16.msra.mxu0 0
    %211 = vmatprep.subr.bf16.mxu0 0
    %212 = vmatpush1.bf16.msra.mxu0 0
    %213 = vmatprep.subr.bf16.mxu0 0
    %214 = vmatpush1.bf16.msra.mxu0 0
    %215 = vmatprep.subr.bf16.mxu0 0
    %216 = vmatpush1.bf16.msra.mxu0 0
    %217 = vmatprep.subr.bf16.mxu0 0
    %218 = vmatpush1.bf16.msra.mxu0 0
    %219 = vmatprep.subr.bf16.mxu0 0
    %220 = vmatpush1.bf16.msra.mxu0 0
    %221 = vmatprep.subr.bf16.mxu0 0
    %222 = vmatpush1.bf16.msra.mxu0 0
    %223 = vmatprep.mubr.bf16.mxu0 0
    %224 = vmatmul.mubr.bf16.gmra.mrb[0].mxu0 %v189
    %v225 = vpop.f32.mrb[0].mxu0
    %v226 = vadd.f32 %v161, %v225
    %v227 = vpop.f32.mrb[0].mxu0
    %v228 = vpop.f32.mrb[0].mxu0
    %v229 = vpop.f32.mrb[0].mxu0
    %230 = vdwg.mxu0
    %v231 = vld [vmem:[#allocation10] sm:$0xf]
    %v232 = vld [vmem:[#allocation10 + $0x4] sm:$0xf]
    %v233 = vld [vmem:[#allocation10 + $0x8] sm:$0xf]
    %v234 = vld [vmem:[#allocation10 + $0xc] sm:$0xf]
    %v235 = vpack.c.bf16 %v140, %v140
    %v236 = vld [vmem:[#allocation11] sm:$0x1]
    %v238 = vlaneseq
    %v239 = vshrl.u32 %v238, 7
    %v240 = vsub.s32 0, %v239
    %v241 = vrot.slane %v236, %v240
    %v247 = vunpack.c.l.b16 %v231
    %v248 = vunpack.c.l.b16 %v232
    %v249 = vunpack.c.l.b16 %v233
    %v250 = vunpack.c.l.b16 %v234
    %v251 = vpack.c.b16 %v248, %v247
    %v252 = vpack.c.b16 %v250, %v249
    %v256 = vsel %vm145, %v235, 0
    %258 = vmatprep.subr.bf16.mxu0 0
    %259 = vmatpush1.bf16.msra.mxu0 %v251
    %260 = vmatprep.subr.bf16.mxu0 0
    %261 = vmatpush1.bf16.msra.mxu0 %v252
    %262 = vmatprep.subr.bf16.mxu0 0
    %263 = vmatpush1.bf16.msra.mxu0 0
    %264 = vmatprep.subr.bf16.mxu0 0
    %265 = vmatpush1.bf16.msra.mxu0 0
    %266 = vmatprep.subr.bf16.mxu0 0
    %267 = vmatpush1.bf16.msra.mxu0 0
    %268 = vmatprep.subr.bf16.mxu0 0
    %269 = vmatpush1.bf16.msra.mxu0 0
    %270 = vmatprep.subr.bf16.mxu0 0
    %271 = vmatpush1.bf16.msra.mxu0 0
    %272 = vmatprep.subr.bf16.mxu0 0
    %273 = vmatpush1.bf16.msra.mxu0 0
    %274 = vmatprep.subr.bf16.mxu0 0
    %275 = vmatpush1.bf16.msra.mxu0 0
    %276 = vmatprep.subr.bf16.mxu0 0
    %277 = vmatpush1.bf16.msra.mxu0 0
    %278 = vmatprep.subr.bf16.mxu0 0
    %279 = vmatpush1.bf16.msra.mxu0 0
    %280 = vmatprep.subr.bf16.mxu0 0
    %281 = vmatpush1.bf16.msra.mxu0 0
    %282 = vmatprep.subr.bf16.mxu0 0
    %283 = vmatpush1.bf16.msra.mxu0 0
    %284 = vmatprep.subr.bf16.mxu0 0
    %285 = vmatpush1.bf16.msra.mxu0 0
    %286 = vmatprep.subr.bf16.mxu0 0
    %287 = vmatpush1.bf16.msra.mxu0 0
    %288 = vmatprep.subr.bf16.mxu0 0
    %289 = vmatpush1.bf16.msra.mxu0 0
    %290 = vmatprep.mubr.bf16.mxu0 0
    %291 = vmatmul.mubr.bf16.gmra.mrb[0].mxu0 %v256
    %v292 = vpop.f32.mrb[0].mxu0
    %v293 = vadd.f32 %v241, %v292
    %v294 = vpop.f32.mrb[0].mxu0
    %v295 = vpop.f32.mrb[0].mxu0
    %v296 = vpop.f32.mrb[0].mxu0
    %297 = vdwg.mxu0
    %v298 = vxor.u32 %v226, 2147483648
    %v299 = vmul.f32 %v298, 1.442695
    %v300 = vpow.pop %v299
    %v301 = vadd.f32 %v300, 1.0
    %v302 = vrcp.pop %v301
    %v303 = vmul.f32 1.0, %v302
    %v304 = vsub.f32 %v303, 1.0
    %v305 = vmul.f32 %v304, %v293
    %307 = vrot.lane.b32.xlu0 %v305, 64
    %v308 = vpop.permute.xlu0 %307
    %v310 = vadd.f32 %v226, %v308
    %v311 = vtanh.pop %v310
    %v312 = vsub.f32 1.0, %v303
    %314 = vrot.lane.b32.xlu0 %v311, 96
    %v315 = vpop.permute.xlu0 %314
    %v317 = vmul.f32 %v312, %v315
    %v318 = vmul.f32 %v303, %v143
    %v319 = vadd.f32 %v317, %v318
    %321 = vrot.lane.b32.xlu0 %v319, 96
    %v322 = vpop.permute.xlu0 %321
    %vm324 = vcmask 257024
    %325 = vst.msk [vmem:[#allocation14] sm:$0xf] %vm324, %v322
    %s326 = scalar_lea.vmem [#allocation5], 4
    %v327 = vld [vmem:[%s326] sm:$0xf]
    %329 = vrot.lane.b32.xlu0 %v327, 32
    %v330 = vpop.permute.xlu0 %329
    %v332 = vsel %vm145, %v322, %v330
    %v333 = vld [vmem:[%s4] sm:$0xf]
    %v334 = vld [vmem:[%s4 + $0x4] sm:$0xf]
    %v335 = vld [vmem:[%s4 + $0x8] sm:$0xf]
    %v336 = vld [vmem:[%s4 + $0xc] sm:$0xf]
    %v337 = vld [vmem:[%s4 + $0x10] sm:$0xf]
    %v338 = vld [vmem:[%s4 + $0x14] sm:$0xf]
    %v339 = vld [vmem:[%s4 + $0x18] sm:$0xf]
    %v340 = vld [vmem:[%s4 + $0x1c] sm:$0xf]
    %v341 = vpack.c.bf16 %v332, %v332
    %s342 = scalar_lea.vmem %s6, 1
    %v343 = vld [vmem:[%s342] sm:$0x1]
    %v345 = vlaneseq
    %v346 = vshrl.u32 %v345, 7
    %v347 = vsub.s32 0, %v346
    %v348 = vrot.slane %v343, %v347
    %v358 = vunpack.c.l.b16 %v333
    %v359 = vunpack.c.l.b16 %v334
    %v360 = vunpack.c.l.b16 %v335
    %v361 = vunpack.c.l.b16 %v336
    %v362 = vunpack.c.l.b16 %v337
    %v363 = vunpack.c.l.b16 %v338
    %v364 = vunpack.c.l.b16 %v339
    %v365 = vunpack.c.l.b16 %v340
    %v366 = vpack.c.b16 %v359, %v358
    %v367 = vpack.c.b16 %v361, %v360
    %v368 = vpack.c.b16 %v363, %v362
    %v369 = vpack.c.b16 %v365, %v364
    %v375 = vsel %vm187, %v341, 0
    %377 = vmatprep.subr.bf16.mxu0 0
    %378 = vmatpush1.bf16.msra.mxu0 %v366
    %379 = vmatprep.subr.bf16.mxu0 0
    %380 = vmatpush1.bf16.msra.mxu0 %v367
    %381 = vmatprep.subr.bf16.mxu0 0
    %382 = vmatpush1.bf16.msra.mxu0 %v368
    %383 = vmatprep.subr.bf16.mxu0 0
    %384 = vmatpush1.bf16.msra.mxu0 %v369
    %385 = vmatprep.subr.bf16.mxu0 0
    %386 = vmatpush1.bf16.msra.mxu0 0
    %387 = vmatprep.subr.bf16.mxu0 0
    %388 = vmatpush1.bf16.msra.mxu0 0
    %389 = vmatprep.subr.bf16.mxu0 0
    %390 = vmatpush1.bf16.msra.mxu0 0
    %391 = vmatprep.subr.bf16.mxu0 0
    %392 = vmatpush1.bf16.msra.mxu0 0
    %393 = vmatprep.subr.bf16.mxu0 0
    %394 = vmatpush1.bf16.msra.mxu0 0
    %395 = vmatprep.subr.bf16.mxu0 0
    %396 = vmatpush1.bf16.msra.mxu0 0
    %397 = vmatprep.subr.bf16.mxu0 0
    %398 = vmatpush1.bf16.msra.mxu0 0
    %399 = vmatprep.subr.bf16.mxu0 0
    %400 = vmatpush1.bf16.msra.mxu0 0
    %401 = vmatprep.subr.bf16.mxu0 0
    %402 = vmatpush1.bf16.msra.mxu0 0
    %403 = vmatprep.subr.bf16.mxu0 0
    %404 = vmatpush1.bf16.msra.mxu0 0
    %405 = vmatprep.subr.bf16.mxu0 0
    %406 = vmatpush1.bf16.msra.mxu0 0
    %407 = vmatprep.subr.bf16.mxu0 0
    %408 = vmatpush1.bf16.msra.mxu0 0
    %409 = vmatprep.mubr.bf16.mxu0 0
    %410 = vmatmul.mubr.bf16.gmra.mrb[0].mxu0 %v375
    %v411 = vpop.f32.mrb[0].mxu0
    %v412 = vadd.f32 %v348, %v411
    %v413 = vpop.f32.mrb[0].mxu0
    %v414 = vpop.f32.mrb[0].mxu0
    %v415 = vpop.f32.mrb[0].mxu0
    %416 = vdwg.mxu0
    %s417 = scalar_lea.vmem [#allocation10], 16
    %v418 = vld [vmem:[%s417] sm:$0xf]
    %v419 = vld [vmem:[%s417 + $0x4] sm:$0xf]
    %v420 = vld [vmem:[%s417 + $0x8] sm:$0xf]
    %v421 = vld [vmem:[%s417 + $0xc] sm:$0xf]
    %v422 = vpack.c.bf16 %v327, %v327
    %s423 = scalar_lea.vmem [#allocation11], 1
    %v424 = vld [vmem:[%s423] sm:$0x1]
    %v426 = vlaneseq
    %v427 = vshrl.u32 %v426, 7
    %v428 = vsub.s32 0, %v427
    %v429 = vrot.slane %v424, %v428
    %v435 = vunpack.c.l.b16 %v418
    %v436 = vunpack.c.l.b16 %v419
    %v437 = vunpack.c.l.b16 %v420
    %v438 = vunpack.c.l.b16 %v421
    %v439 = vpack.c.b16 %v436, %v435
    %v440 = vpack.c.b16 %v438, %v437
    %v444 = vsel %vm145, %v422, 0
    %446 = vmatprep.subr.bf16.mxu0 0
    %447 = vmatpush1.bf16.msra.mxu0 %v439
    %448 = vmatprep.subr.bf16.mxu0 0
    %449 = vmatpush1.bf16.msra.mxu0 %v440
    %450 = vmatprep.subr.bf16.mxu0 0
    %451 = vmatpush1.bf16.msra.mxu0 0
    %452 = vmatprep.subr.bf16.mxu0 0
    %453 = vmatpush1.bf16.msra.mxu0 0
    %454 = vmatprep.subr.bf16.mxu0 0
    %455 = vmatpush1.bf16.msra.mxu0 0
    %456 = vmatprep.subr.bf16.mxu0 0
    %457 = vmatpush1.bf16.msra.mxu0 0
    %458 = vmatprep.subr.bf16.mxu0 0
    %459 = vmatpush1.bf16.msra.mxu0 0
    %460 = vmatprep.subr.bf16.mxu0 0
    %461 = vmatpush1.bf16.msra.mxu0 0
    %462 = vmatprep.subr.bf16.mxu0 0
    %463 = vmatpush1.bf16.msra.mxu0 0
    %464 = vmatprep.subr.bf16.mxu0 0
    %465 = vmatpush1.bf16.msra.mxu0 0
    %466 = vmatprep.subr.bf16.mxu0 0
    %467 = vmatpush1.bf16.msra.mxu0 0
    %468 = vmatprep.subr.bf16.mxu0 0
    %469 = vmatpush1.bf16.msra.mxu0 0
    %470 = vmatprep.subr.bf16.mxu0 0
    %471 = vmatpush1.bf16.msra.mxu0 0
    %472 = vmatprep.subr.bf16.mxu0 0
    %473 = vmatpush1.bf16.msra.mxu0 0
    %474 = vmatprep.subr.bf16.mxu0 0
    %475 = vmatpush1.bf16.msra.mxu0 0
    %476 = vmatprep.subr.bf16.mxu0 0
    %477 = vmatpush1.bf16.msra.mxu0 0
    %478 = vmatprep.mubr.bf16.mxu0 0
    %479 = vmatmul.mubr.bf16.gmra.mrb[0].mxu0 %v444
    %v480 = vpop.f32.mrb[0].mxu0
    %v481 = vadd.f32 %v429, %v480
    %v482 = vpop.f32.mrb[0].mxu0
    %v483 = vpop.f32.mrb[0].mxu0
    %v484 = vpop.f32.mrb[0].mxu0
    %485 = vdwg.mxu0
    %v486 = vxor.u32 %v412, 2147483648
    %v487 = vmul.f32 %v486, 1.442695
    %v488 = vpow.pop %v487
    %v489 = vadd.f32 %v488, 1.0
    %v490 = vrcp.pop %v489
    %v491 = vmul.f32 1.0, %v490
    %v492 = vsub.f32 %v491, 1.0
    %v493 = vmul.f32 %v492, %v481
    %495 = vrot.lane.b32.xlu0 %v493, 64
    %v496 = vpop.permute.xlu0 %495
    %v498 = vadd.f32 %v412, %v496
    %v499 = vtanh.pop %v498
    %v500 = vsub.f32 1.0, %v491
    %502 = vrot.lane.b32.xlu0 %v499, 96
    %v503 = vpop.permute.xlu0 %502
    %v505 = vmul.f32 %v500, %v503
    %v506 = vmul.f32 %v491, %v330
    %v507 = vadd.f32 %v505, %v506
    %509 = vrot.lane.b32.xlu0 %v507, 96
    %v510 = vpop.permute.xlu0 %509
    %s512 = scalar_lea.vmem [#allocation14], 4
    %513 = vst.msk [vmem:[%s512] sm:$0xf] %vm324, %v510
    %v514 = vld [vmem:[#allocation7] sm:$0xff]
    %v515 = vld [vmem:[#allocation7 + $0x8] sm:$0xff]
    %v516 = vld [vmem:[#allocation7 + $0x10] sm:$0xff]
    %v517 = vld [vmem:[#allocation7 + $0x18] sm:$0xff]
    %v518 = vld [vmem:[#allocation13] sm:$0xf]
    %v519 = vld [vmem:[#allocation13 + $0x4] sm:$0xf]
    %v520 = vld [vmem:[#allocation13 + $0x8] sm:$0xf]
    %v521 = vld [vmem:[#allocation13 + $0xc] sm:$0xf]
    %v522 = vpack.c.bf16 %v507, %v507
    %v523 = vld [vmem:[%s10] sm:$0x1]
    %v525 = vlaneseq
    %v526 = vshrl.u32 %v525, 7
    %v527 = vsub.s32 0, %v526
    %v528 = vrot.slane %v523, %v527
    %531 = vrot.lane.b32.xlu0 %v522, 96
    %v532 = vpop.permute.xlu0 %531
    %v537 = vunpack.c.l.b16 %v518
    %v538 = vunpack.c.l.b16 %v519
    %v539 = vunpack.c.l.b16 %v520
    %v540 = vunpack.c.l.b16 %v521
    %v541 = vpack.c.b16 %v538, %v537
    %v542 = vpack.c.b16 %v540, %v539
    %v546 = vsel %vm145, %v532, 0
    %548 = vmatprep.subr.bf16.mxu0 0
    %549 = vmatpush1.bf16.msra.mxu0 %v541
    %550 = vmatprep.subr.bf16.mxu0 0
    %551 = vmatpush1.bf16.msra.mxu0 %v542
    %552 = vmatprep.subr.bf16.mxu0 0
    %553 = vmatpush1.bf16.msra.mxu0 0
    %554 = vmatprep.subr.bf16.mxu0 0
    %555 = vmatpush1.bf16.msra.mxu0 0
    %556 = vmatprep.subr.bf16.mxu0 0
    %557 = vmatpush1.bf16.msra.mxu0 0
    %558 = vmatprep.subr.bf16.mxu0 0
    %559 = vmatpush1.bf16.msra.mxu0 0
    %560 = vmatprep.subr.bf16.mxu0 0
    %561 = vmatpush1.bf16.msra.mxu0 0
    %562 = vmatprep.subr.bf16.mxu0 0
    %563 = vmatpush1.bf16.msra.mxu0 0
    %564 = vmatprep.subr.bf16.mxu0 0
    %565 = vmatpush1.bf16.msra.mxu0 0
    %566 = vmatprep.subr.bf16.mxu0 0
    %567 = vmatpush1.bf16.msra.mxu0 0
    %568 = vmatprep.subr.bf16.mxu0 0
    %569 = vmatpush1.bf16.msra.mxu0 0
    %570 = vmatprep.subr.bf16.mxu0 0
    %571 = vmatpush1.bf16.msra.mxu0 0
    %572 = vmatprep.subr.bf16.mxu0 0
    %573 = vmatpush1.bf16.msra.mxu0 0
    %574 = vmatprep.subr.bf16.mxu0 0
    %575 = vmatpush1.bf16.msra.mxu0 0
    %576 = vmatprep.subr.bf16.mxu0 0
    %577 = vmatpush1.bf16.msra.mxu0 0
    %578 = vmatprep.subr.bf16.mxu0 0
    %579 = vmatpush1.bf16.msra.mxu0 0
    %580 = vmatprep.mubr.bf16.mxu0 0
    %581 = vmatmul.mubr.bf16.gmra.mrb[0].mxu0 %v546
    %v582 = vpop.f32.mrb[0].mxu0
    %v583 = vadd.f32 %v528, %v582
    %v584 = vpop.f32.mrb[0].mxu0
    %v585 = vpop.f32.mrb[0].mxu0
    %v586 = vpop.f32.mrb[0].mxu0
    %587 = vdwg.mxu0
    %v588 = vld [vmem:[%s9] sm:$0xf]
    %v589 = vld [vmem:[%s9 + $0x4] sm:$0xf]
    %v590 = vld [vmem:[%s9 + $0x8] sm:$0xf]
    %v591 = vld [vmem:[%s9 + $0xc] sm:$0xf]
    %v592 = vpack.c.bf16 %v515, %v514
    %v593 = vpack.c.bf16 %v517, %v516
    %v598 = vunpack.c.l.b16 %v588
    %v599 = vunpack.c.l.b16 %v589
    %v600 = vunpack.c.l.b16 %v590
    %v601 = vunpack.c.l.b16 %v591
    %v602 = vpack.c.b16 %v599, %v598
    %v603 = vpack.c.b16 %v601, %v600
    %v607 = vsel %vm145, %v592, 0
    %v610 = vsel %vm145, %v593, 0
    %612 = vmatprep.subr.bf16.mxu0 0
    %613 = vmatpush1.bf16.msra.mxu0 %v602
    %614 = vmatprep.subr.bf16.mxu0 0
    %615 = vmatpush1.bf16.msra.mxu0 %v603
    %616 = vmatprep.subr.bf16.mxu0 0
    %617 = vmatpush1.bf16.msra.mxu0 0
    %618 = vmatprep.subr.bf16.mxu0 0
    %619 = vmatpush1.bf16.msra.mxu0 0
    %620 = vmatprep.subr.bf16.mxu0 0
    %621 = vmatpush1.bf16.msra.mxu0 0
    %622 = vmatprep.subr.bf16.mxu0 0
    %623 = vmatpush1.bf16.msra.mxu0 0
    %624 = vmatprep.subr.bf16.mxu0 0
    %625 = vmatpush1.bf16.msra.mxu0 0
    %626 = vmatprep.subr.bf16.mxu0 0
    %627 = vmatpush1.bf16.msra.mxu0 0
    %628 = vmatprep.subr.bf16.mxu0 0
    %629 = vmatpush1.bf16.msra.mxu0 0
    %630 = vmatprep.subr.bf16.mxu0 0
    %631 = vmatpush1.bf16.msra.mxu0 0
    %632 = vmatprep.subr.bf16.mxu0 0
    %633 = vmatpush1.bf16.msra.mxu0 0
    %634 = vmatprep.subr.bf16.mxu0 0
    %635 = vmatpush1.bf16.msra.mxu0 0
    %636 = vmatprep.subr.bf16.mxu0 0
    %637 = vmatpush1.bf16.msra.mxu0 0
    %638 = vmatprep.subr.bf16.mxu0 0
    %639 = vmatpush1.bf16.msra.mxu0 0
    %640 = vmatprep.subr.bf16.mxu0 0
    %641 = vmatpush1.bf16.msra.mxu0 0
    %642 = vmatprep.subr.bf16.mxu0 0
    %643 = vmatpush1.bf16.msra.mxu0 0
    %644 = vmatprep.mubr.bf16.mxu0 0
    %645 = vmatmul.mubr.bf16.gmra.mrb[0].mxu0 %v607
    %v646 = vpop.f32.mrb[0].mxu0
    %v647 = vadd.f32 0.0, %v646
    %v648 = vpop.f32.mrb[0].mxu0
    %v649 = vpop.f32.mrb[0].mxu0
    %v650 = vadd.f32 0.0, %v649
    %v651 = vpop.f32.mrb[0].mxu0
    %652 = vmatprep.mubr.bf16.mxu0 0
    %653 = vmatmul.mubr.bf16.gmra.mrb[0].mxu0 %v610
    %v654 = vpop.f32.mrb[0].mxu0
    %v655 = vadd.f32 0.0, %v654
    %v656 = vpop.f32.mrb[0].mxu0
    %v657 = vpop.f32.mrb[0].mxu0
    %v658 = vadd.f32 0.0, %v657
    %v659 = vpop.f32.mrb[0].mxu0
    %660 = vdwg.mxu0
    %v663 = vunpack.c.l.s4 1966171168
    %v664 = vunpack.c.0.s8 %v663
    %v665 = vlaneseq
    %v666 = vshrl.u32 %v665, 7
    %v667 = vsub.s32 %v664, %v666
    %v668 = vrot.slane %v583, %v667
    %v669 = vcombine.high %v668, %v668
    %v671 = vunpack.c.l.s4 1966171168
    %v672 = vunpack.c.0.s8 %v671
    %v673 = vlaneseq
    %v674 = vshrl.u32 %v673, 7
    %v675 = vsub.s32 %v672, %v674
    %v676 = vrot.slane %v668, %v675
    %v678 = vunpack.c.l.s4 1966171168
    %v679 = vunpack.c.0.s8 %v678
    %v680 = vlaneseq
    %v681 = vshrl.u32 %v680, 7
    %v682 = vsub.s32 %v679, %v681
    %v683 = vrot.slane %v669, %v682
    %v684 = vcombine.high %v676, %v676
    %v685 = vcombine.high %v683, %v683
    %v686 = vlaneseq
    %v687 = vshrl.u32 %v686, 7
    %v688 = vsub.s32 0, %v687
    %v689 = vrot.slane %v676, %v688
    %v690 = vlaneseq
    %v691 = vshrl.u32 %v690, 7
    %v692 = vsub.s32 0, %v691
    %v693 = vrot.slane %v683, %v692
    %v694 = vlaneseq
    %v695 = vshrl.u32 %v694, 7
    %v696 = vsub.s32 0, %v695
    %v697 = vrot.slane %v684, %v696
    %v698 = vlaneseq
    %v699 = vshrl.u32 %v698, 7
    %v700 = vsub.s32 0, %v699
    %v701 = vrot.slane %v685, %v700
    %v706 = vadd.f32 %v647, %v689
    %v707 = vadd.f32 %v650, %v693
    %v708 = vadd.f32 %v655, %v697
    %v709 = vadd.f32 %v658, %v701
    %v710 = vtanh.pop %v706
    %v711 = vtanh.pop %v707
    %v712 = vtanh.pop %v708
    %v713 = vtanh.pop %v709
    %v714 = vld [vmem:[%s11] sm:$0xf]
    %v715 = vld [vmem:[%s11 + $0x4] sm:$0xf]
    %v716 = vld [vmem:[%s11 + $0x8] sm:$0xf]
    %v717 = vld [vmem:[%s11 + $0xc] sm:$0xf]
    %v718 = vpack.c.bf16 %v711, %v710
    %v719 = vpack.c.bf16 %v713, %v712
    %v724 = vunpack.c.l.b16 %v714
    %v725 = vunpack.c.l.b16 %v715
    %v726 = vunpack.c.l.b16 %v716
    %v727 = vunpack.c.l.b16 %v717
    %v728 = vpack.c.b16 %v725, %v724
    %v729 = vpack.c.b16 %v727, %v726
    %v733 = vsel %vm145, %v718, 0
    %v736 = vsel %vm145, %v719, 0
    %738 = vmatprep.subr.bf16.mxu0 0
    %739 = vmatpush1.bf16.msra.mxu0 %v728
    %740 = vmatprep.subr.bf16.mxu0 0
    %741 = vmatpush1.bf16.msra.mxu0 %v729
    %742 = vmatprep.subr.bf16.mxu0 0
    %743 = vmatpush1.bf16.msra.mxu0 0
    %744 = vmatprep.subr.bf16.mxu0 0
    %745 = vmatpush1.bf16.msra.mxu0 0
    %746 = vmatprep.subr.bf16.mxu0 0
    %747 = vmatpush1.bf16.msra.mxu0 0
    %748 = vmatprep.subr.bf16.mxu0 0
    %749 = vmatpush1.bf16.msra.mxu0 0
    %750 = vmatprep.subr.bf16.mxu0 0
    %751 = vmatpush1.bf16.msra.mxu0 0
    %752 = vmatprep.subr.bf16.mxu0 0
    %753 = vmatpush1.bf16.msra.mxu0 0
    %754 = vmatprep.subr.bf16.mxu0 0
    %755 = vmatpush1.bf16.msra.mxu0 0
    %756 = vmatprep.subr.bf16.mxu0 0
    %757 = vmatpush1.bf16.msra.mxu0 0
    %758 = vmatprep.subr.bf16.mxu0 0
    %759 = vmatpush1.bf16.msra.mxu0 0
    %760 = vmatprep.subr.bf16.mxu0 0
    %761 = vmatpush1.bf16.msra.mxu0 0
    %762 = vmatprep.subr.bf16.mxu0 0
    %763 = vmatpush1.bf16.msra.mxu0 0
    %764 = vmatprep.subr.bf16.mxu0 0
    %765 = vmatpush1.bf16.msra.mxu0 0
    %766 = vmatprep.subr.bf16.mxu0 0
    %767 = vmatpush1.bf16.msra.mxu0 0
    %768 = vmatprep.subr.bf16.mxu0 0
    %769 = vmatpush1.bf16.msra.mxu0 0
    %770 = vmatprep.mubr.bf16.mxu0 0
    %771 = vmatmul.mubr.bf16.gmra.mrb[0].mxu0 %v733
    %v772 = vpop.f32.mrb[0].mxu0
    %v773 = vadd.f32 0.0, %v772
    %v774 = vpop.f32.mrb[0].mxu0
    %v775 = vpop.f32.mrb[0].mxu0
    %v776 = vadd.f32 0.0, %v775
    %v777 = vpop.f32.mrb[0].mxu0
    %778 = vmatprep.mubr.bf16.mxu0 0
    %779 = vmatmul.mubr.bf16.gmra.mrb[0].mxu0 %v736
    %v780 = vpop.f32.mrb[0].mxu0
    %v781 = vadd.f32 0.0, %v780
    %v782 = vpop.f32.mrb[0].mxu0
    %v783 = vpop.f32.mrb[0].mxu0
    %v784 = vadd.f32 0.0, %v783
    %v785 = vpop.f32.mrb[0].mxu0
    %786 = vdwg.mxu0
    %vm787 = vcmask 7168
    %v788 = vsel %vm787, %v773, -inf
    %v789 = vrot.slane %v788, 4
    %v790 = vmax.f32 %v788, %v789
    %v791 = vrot.slane %v790, 2
    %v792 = vmax.f32 %v790, %v791
    %v793 = vrot.slane %v792, 1
    %v794 = vmax.f32 %v792, %v793
    %v795 = vsel %vm787, %v776, -inf
    %v796 = vrot.slane %v795, 4
    %v797 = vmax.f32 %v795, %v796
    %v798 = vrot.slane %v797, 2
    %v799 = vmax.f32 %v797, %v798
    %v800 = vrot.slane %v799, 1
    %v801 = vmax.f32 %v799, %v800
    %v802 = vsel %vm787, %v781, -inf
    %v803 = vrot.slane %v802, 4
    %v804 = vmax.f32 %v802, %v803
    %v805 = vrot.slane %v804, 2
    %v806 = vmax.f32 %v804, %v805
    %v807 = vrot.slane %v806, 1
    %v808 = vmax.f32 %v806, %v807
    %v809 = vsel %vm787, %v784, -inf
    %v810 = vrot.slane %v809, 4
    %v811 = vmax.f32 %v809, %v810
    %v812 = vrot.slane %v811, 2
    %v813 = vmax.f32 %v811, %v812
    %v814 = vrot.slane %v813, 1
    %v815 = vmax.f32 %v813, %v814
    %v816 = vsub.f32 %v773, %v794
    %v817 = vsub.f32 %v776, %v801
    %v818 = vsub.f32 %v781, %v808
    %v819 = vsub.f32 %v784, %v815
    %v820 = vmul.f32 %v816, 1.442695
    %v821 = vpow.pop %v820
    %v822 = vmul.f32 %v817, 1.442695
    %v823 = vpow.pop %v822
    %v824 = vmul.f32 %v818, 1.442695
    %v825 = vpow.pop %v824
    %v826 = vmul.f32 %v819, 1.442695
    %v827 = vpow.pop %v826
    %v828 = vsel %vm787, %v821, 0.0
    %v829 = vrot.slane %v828, 4
    %v830 = vadd.f32 %v828, %v829
    %v831 = vrot.slane %v830, 2
    %v832 = vadd.f32 %v830, %v831
    %v833 = vrot.slane %v832, 1
    %v834 = vadd.f32 %v832, %v833
    %v835 = vsel %vm787, %v823, 0.0
    %v836 = vrot.slane %v835, 4
    %v837 = vadd.f32 %v835, %v836
    %v838 = vrot.slane %v837, 2
    %v839 = vadd.f32 %v837, %v838
    %v840 = vrot.slane %v839, 1
    %v841 = vadd.f32 %v839, %v840
    %v842 = vsel %vm787, %v825, 0.0
    %v843 = vrot.slane %v842, 4
    %v844 = vadd.f32 %v842, %v843
    %v845 = vrot.slane %v844, 2
    %v846 = vadd.f32 %v844, %v845
    %v847 = vrot.slane %v846, 1
    %v848 = vadd.f32 %v846, %v847
    %v849 = vsel %vm787, %v827, 0.0
    %v850 = vrot.slane %v849, 4
    %v851 = vadd.f32 %v849, %v850
    %v852 = vrot.slane %v851, 2
    %v853 = vadd.f32 %v851, %v852
    %v854 = vrot.slane %v853, 1
    %v855 = vadd.f32 %v853, %v854
    %v856 = vrcp.pop %v834
    %v857 = vrcp.pop %v841
    %v858 = vrcp.pop %v848
    %v859 = vrcp.pop %v855
    %v860 = vmul.f32 %v821, %v856
    %v861 = vmul.f32 %v823, %v857
    %v862 = vmul.f32 %v825, %v858
    %v863 = vmul.f32 %v827, %v859
    %865 = vset.pattern.permute.xlu0 0
    %866 = vperm.xlu0 %865, %v860
    %v867 = vpop.permute.xlu0 %866
    %870 = vset.pattern.permute.xlu0 0
    %871 = vperm.xlu0 %870, %v861
    %v872 = vpop.permute.xlu0 %871
    %875 = vset.pattern.permute.xlu0 0
    %876 = vperm.xlu0 %875, %v862
    %v877 = vpop.permute.xlu0 %876
    %880 = vset.pattern.permute.xlu0 0
    %881 = vperm.xlu0 %880, %v863
    %v882 = vpop.permute.xlu0 %881
    %v884 = vmul.f32 %v867, %v514
    %v885 = vmul.f32 %v872, %v515
    %v886 = vmul.f32 %v877, %v516
    %v887 = vmul.f32 %v882, %v517
    %v888 = vsel %vm145, %v884, 0.0
    %v889 = vrot.slane %v888, 4
    %v890 = vadd.f32 %v888, %v889
    %v891 = vrot.slane %v890, 2
    %v892 = vadd.f32 %v890, %v891
    %v893 = vrot.slane %v892, 1
    %v894 = vadd.f32 %v892, %v893
    %v895 = vsel %vm145, %v885, 0.0
    %v896 = vrot.slane %v895, 4
    %v897 = vadd.f32 %v895, %v896
    %v898 = vrot.slane %v897, 2
    %v899 = vadd.f32 %v897, %v898
    %v900 = vrot.slane %v899, 1
    %v901 = vadd.f32 %v899, %v900
    %v902 = vsel %vm145, %v886, 0.0
    %v903 = vrot.slane %v902, 4
    %v904 = vadd.f32 %v902, %v903
    %v905 = vrot.slane %v904, 2
    %v906 = vadd.f32 %v904, %v905
    %v907 = vrot.slane %v906, 1
    %v908 = vadd.f32 %v906, %v907
    %v909 = vsel %vm145, %v887, 0.0
    %v910 = vrot.slane %v909, 4
    %v911 = vadd.f32 %v909, %v910
    %v912 = vrot.slane %v911, 2
    %v913 = vadd.f32 %v911, %v912
    %v914 = vrot.slane %v913, 1
    %v915 = vadd.f32 %v913, %v914
    %vm920 = vcmask 1041409
    %v921 = vsel %vm920, %v901, %v894
    %vm922 = vcmask 1042434
    %v923 = vsel %vm922, %v908, %v921
    %vm924 = vcmask 1043459
    %v925 = vsel %vm924, %v915, %v923
    %926 = vrot.lane.b32.xlu0 %v925, 32
    %v927 = vpop.permute.xlu0 %926
    %v929 = vsel %vm145, %v510, %v927
    %v930 = vpack.c.bf16 %v929, %v929
    %vm931 = vcmask 517120
    %932 = vst.msk [vmem:[#allocation15] sm:$0x3] %vm931, %v930
    // Predicated region
    $region78: #{tpu_custom_call.1} parent=1 // pred_check
      _
    $region79: #{tpu_custom_call.1} parent=1 // pred_check_branch
      %934 = sbr.rel (0) target = $region81
    $region80: #{tpu_custom_call.1} parent=1 // pred_region
      %s936 = ssub.s32 128, 128
      %937 = vsyncadd [#allocation4], %s936
      %s938 = sshll.u32 [#allocation14], 4
      %s939 = int_to_ptr.vmem [resolvable:$true] %s938
      %944 = dma.vmem_to_hbm [thread:$0]  %s939, 128, %s12, [#allocation4], 64, 64, 4
    $region81: #{tpu_custom_call.1} parent=1 // pred_fallthru
      _
    // Predicated region
    $region82: #{tpu_custom_call.1} parent=1 // pred_check
      _
    $region83: #{tpu_custom_call.1} parent=1 // pred_check_branch
      %946 = sbr.rel (0) target = $region85
    $region84: #{tpu_custom_call.1} parent=1 // pred_region
      %s948 = ssub.s32 32, 32
      %949 = vsyncadd [#allocation16], %s948
      %s951 = sshll.u32 [#allocation15], 4
      %s952 = int_to_ptr.vmem [resolvable:$true] %s951
      %954 = dma.vmem_to_hbm [thread:$0]  %s952, 32, %s13, [#allocation16]
    $region85: #{tpu_custom_call.1} parent=1 // pred_fallthru
      _
    // Predicated region
    $region86: #{tpu_custom_call.1} parent=1 // pred_check
      _
    $region87: #{tpu_custom_call.1} parent=1 // pred_check_branch
      %956 = sbr.rel (0) target = $region89
    $region88: #{tpu_custom_call.1} parent=1 // pred_region
      %957 = dma.done [#allocation4], 128
    $region89: #{tpu_custom_call.1} parent=1 // pred_fallthru
      _
    // Predicated region
    $region90: #{tpu_custom_call.1} parent=1 // pred_check
      _
    $region91: #{tpu_custom_call.1} parent=1 // pred_check_branch
      %959 = sbr.rel (0) target = $region93
    $region92: #{tpu_custom_call.1} parent=1 // pred_region
      %960 = dma.done [#allocation16], 32
    $region93: #{tpu_custom_call.1} parent=1 // pred_fallthru
      _
    %961 = vsyncpa [#allocation3], 1
    %962 = vsyncpa [#allocation6], 1
    %963 = vsyncpa [#allocation9], 1
    %964 = vsyncpa [#allocation12], 1
    %965 = vsyncpa [#allocation4], 1
    %966 = vsyncpa [#allocation16], 1

</llo_original>
